<compile_context>
chip_gen: v7x
topology: tpu7x:2x2x1
jax: 0.10.0
libtpu: 0.0.40
codegen_flags: <defaults>
</compile_context>

<pallas_src>
import jax
import jax.numpy as jnp
from jax.experimental import pallas as pl
from jax.experimental.pallas import tpu as pltpu


def _make_senet_kernel(num_fields):
    """Build a kernel for `num_fields` field inputs.

    Kernel refs (in order): F field refs of shape (TB, E), w1 (F, R), w2 (R, F),
    out (TB, F*E).
    """

    def kernel(*refs):
        field_refs = refs[:num_fields]
        w1_ref = refs[num_fields]
        w2_ref = refs[num_fields + 1]
        out_ref = refs[num_fields + 2]

        xs = [r[...] for r in field_refs]               # F x (TB, E), input dtype
        x_dtype = xs[0].dtype

        # Squeeze: per-field mean over the embedding axis, accumulated in f32.
        # Only the tiny (TB, F) statistics live in f32; the (TB, E) blocks stay
        # in their input dtype.
        z = jnp.concatenate(
            [jnp.mean(x.astype(jnp.float32), axis=-1, keepdims=True) for x in xs],
            axis=-1,
        )                                               # (TB, F) f32

        # Excitation: two ReLU'd matmuls.  K and N are tiny, but M = TB is large,
        # so the batched jnp.dot is fine (FLOPs are negligible; kernel is HBM-bound).
        a1 = jnp.maximum(
            jnp.dot(z, w1_ref[...], preferred_element_type=jnp.float32), 0.0
        )                                               # (TB, R)
        a2 = jnp.maximum(
            jnp.dot(a1, w2_ref[...], preferred_element_type=jnp.float32), 0.0
        )                                               # (TB, F)
        scale = a2.astype(x_dtype)                      # multiply in input dtype

        # Re-weight each field and emit a single lane-dense (TB, F*E) slab.
        v = jnp.concatenate(
            [xs[f] * scale[:, f : f + 1] for f in range(num_fields)], axis=-1
        )
        out_ref[...] = v.astype(out_ref.dtype)

    return kernel


def _choose_batch_tile(batch, num_fields, emb, itemsize):
    """Pick rows-per-grid-step so the double-buffered working set stays small.

    Budget ~8 MiB: safe under v5e's 16 MiB scoped-VMEM default and v7x's 32 MiB,
    while big enough (hundreds-to-thousands of rows) to run near HBM roofline.
    """
    lane = 128
    in_row = num_fields * (-(-emb // lane)) * lane * itemsize        # padded input bytes/row
    out_row = (-(-(num_fields * emb) // lane)) * lane * itemsize     # padded output bytes/row
    per_row = 2 * (in_row + out_row)                                 # x2 for double buffering
    budget = 8 * 1024 * 1024
    tb = budget // max(per_row, 1)
    tb = max(8, min(1024, (tb // 8) * 8))
    if tb >= batch:
        return batch        # single full-extent block (always layout-legal)
    return tb               # multiple of 8 -> legal sublane tiling; last block may be partial


def senet_forward(fields, w1, w2):
    """fields: list of F arrays of shape (B, E); w1: (F, R); w2: (R, F).

    Returns V of shape (B, F, E).
    """
    num_fields = len(fields)
    batch, emb = fields[0].shape
    red = w1.shape[1]
    dtype = fields[0].dtype
    itemsize = jnp.dtype(dtype).itemsize

    tb = _choose_batch_tile(batch, num_fields, emb, itemsize)
    grid = (pl.cdiv(batch, tb),)

    in_specs = [pl.BlockSpec((tb, emb), lambda b: (b, 0)) for _ in range(num_fields)]
    in_specs += [
        pl.BlockSpec((num_fields, red), lambda b: (0, 0)),   # W_1 resident
        pl.BlockSpec((red, num_fields), lambda b: (0, 0)),   # W_2 resident
    ]
    out_specs = pl.BlockSpec((tb, num_fields * emb), lambda b: (b, 0))

    cost = pl.CostEstimate(
        flops=2 * batch * num_fields * emb + 4 * batch * num_fields * red,
        transcendentals=0,
        bytes_accessed=2 * batch * num_fields * emb * itemsize,
    )

    v_flat = pl.pallas_call(
        _make_senet_kernel(num_fields),
        out_shape=jax.ShapeDtypeStruct((batch, num_fields * emb), dtype),
        grid_spec=pltpu.PrefetchScalarGridSpec(
            num_scalar_prefetch=0,
            grid=grid,
            in_specs=in_specs,
            out_specs=out_specs,
        ),
        compiler_params=pltpu.CompilerParams(
            dimension_semantics=("parallel",),
        ),
        cost_estimate=cost,
    )(*fields, w1, w2)

    # Free bitcast back to (B, F, E).
    return v_flat.reshape(batch, num_fields, emb)


class SENETLayerPallas:
    def __init__(self, input_shape, reduction_ratio=3, seed=1024):
        if not isinstance(input_shape, list) or len(input_shape) < 2:
            raise ValueError("input_shape must be a list of at least 2 field shapes")
        self.filed_size = len(input_shape)
        self.embedding_size = input_shape[0][-1]
        self.reduction_ratio = reduction_ratio
        reduction_size = max(1, self.filed_size // self.reduction_ratio)
        # TODO(synk): torch.randn(seed) init is not bit-reproduced; jax.random.normal stands in.
        k1, k2 = jax.random.split(jax.random.PRNGKey(seed))
        self.W_1 = jax.random.normal(k1, (self.filed_size, reduction_size), jnp.float32)
        self.W_2 = jax.random.normal(k2, (reduction_size, self.filed_size), jnp.float32)

    def __call__(self, inputs):
        # inputs: list of (B, 1, E) arrays
        if inputs[0].ndim != 3:
            raise ValueError("Expected 3D field embeddings (B, 1, E)")
        batch = inputs[0].shape[0]
        emb = inputs[0].shape[-1]
        # Free reshape (B, 1, E) -> (B, E); the field concatenation happens inside
        # the kernel's VMEM, never materialized in HBM.
        fields = [jnp.reshape(x, (batch, emb)) for x in inputs]
        v = senet_forward(fields, self.W_1, self.W_2)  # (B, F, E)
        # torch.split(V, filed_size, dim=1) with dim-1 size == filed_size -> single chunk
        return (v,)


if __name__ == "__main__":
    B, F, E = 2, 4, 16  # batch, num fields, embedding size
    input_shape = [(1, E)] * F

    layer = SENETLayerPallas(input_shape, reduction_ratio=3, seed=1024)

    key = jax.random.PRNGKey(0)
    keys = jax.random.split(key, F)
    field_embs = [jax.random.normal(keys[i], (B, 1, E), jnp.float32) for i in range(F)]

    (v,) = layer(field_embs)
    v = jax.block_until_ready(v)

    # reference check in plain JAX
    x = jnp.concatenate(field_embs, axis=1)           # (B, F, E)
    z = jnp.mean(x, axis=-1)
    a1 = jnp.maximum(z @ layer.W_1, 0.0)
    a2 = jnp.maximum(a1 @ layer.W_2, 0.0)[:, :, None]
    ref = x * a2
    assert v.shape == (B, F, E)
    assert jnp.allclose(v, ref, atol=1e-5, rtol=1e-5)

    print("KERNEL_OK")
</pallas_src>

<mosaic_0001>
module attributes {stable_mosaic.version = 11 : i64} {
  func.func @kernel(%arg0: i32, %arg1: memref<2x16xf32, #tpu.memory_space<vmem>>, %arg2: memref<2x16xf32, #tpu.memory_space<vmem>>, %arg3: memref<2x16xf32, #tpu.memory_space<vmem>>, %arg4: memref<2x16xf32, #tpu.memory_space<vmem>>, %arg5: memref<4x1xf32, #tpu.memory_space<vmem>>, %arg6: memref<1x4xf32, #tpu.memory_space<vmem>>, %arg7: memref<2x64xf32, #tpu.memory_space<vmem>>) attributes {dimension_semantics = [#tpu.dimension_semantics<parallel>], iteration_bounds = array<i64: 1>, scalar_prefetch = 0 : i64, scratch_operands = 0 : i64, tpu.core_type = #tpu.core_type<tc>, window_params = [{transform_indices = @transform_0, window_bounds = array<i64: 2, 16>}, {transform_indices = @transform_1, window_bounds = array<i64: 2, 16>}, {transform_indices = @transform_2, window_bounds = array<i64: 2, 16>}, {transform_indices = @transform_3, window_bounds = array<i64: 2, 16>}, {pipeline_mode = #tpu.pipeline_mode<synchronous>, transform_indices = @transform_4, window_bounds = array<i64: 4, 1>}, {pipeline_mode = #tpu.pipeline_mode<synchronous>, transform_indices = @transform_5, window_bounds = array<i64: 1, 4>}, {transform_indices = @transform_6, window_bounds = array<i64: 2, 64>}]} {
    %c0 = arith.constant 0 : index
    %c0_0 = arith.constant 0 : index
    %0 = vector.load %arg1[%c0, %c0_0] : memref<2x16xf32, #tpu.memory_space<vmem>>, vector<2x16xf32>
    %c0_1 = arith.constant 0 : index
    %c0_2 = arith.constant 0 : index
    %1 = vector.load %arg2[%c0_1, %c0_2] : memref<2x16xf32, #tpu.memory_space<vmem>>, vector<2x16xf32>
    %c0_3 = arith.constant 0 : index
    %c0_4 = arith.constant 0 : index
    %2 = vector.load %arg3[%c0_3, %c0_4] : memref<2x16xf32, #tpu.memory_space<vmem>>, vector<2x16xf32>
    %c0_5 = arith.constant 0 : index
    %c0_6 = arith.constant 0 : index
    %3 = vector.load %arg4[%c0_5, %c0_6] : memref<2x16xf32, #tpu.memory_space<vmem>>, vector<2x16xf32>
    %cst = arith.constant dense<0.000000e+00> : vector<2xf32>
    %4 = vector.multi_reduction <add>, %0, %cst [1] : vector<2x16xf32> to vector<2xf32>
    %5 = vector.shape_cast %4 : vector<2xf32> to vector<2x1xf32>
    %cst_7 = arith.constant 1.600000e+01 : f32
    %6 = vector.broadcast %cst_7 : f32 to vector<2x1xf32>
    %7 = arith.divf %5, %6 : vector<2x1xf32>
    %cst_8 = arith.constant dense<0.000000e+00> : vector<2xf32>
    %8 = vector.multi_reduction <add>, %1, %cst_8 [1] : vector<2x16xf32> to vector<2xf32>
    %9 = vector.shape_cast %8 : vector<2xf32> to vector<2x1xf32>
    %cst_9 = arith.constant 1.600000e+01 : f32
    %10 = vector.broadcast %cst_9 : f32 to vector<2x1xf32>
    %11 = arith.divf %9, %10 : vector<2x1xf32>
    %cst_10 = arith.constant dense<0.000000e+00> : vector<2xf32>
    %12 = vector.multi_reduction <add>, %2, %cst_10 [1] : vector<2x16xf32> to vector<2xf32>
    %13 = vector.shape_cast %12 : vector<2xf32> to vector<2x1xf32>
    %cst_11 = arith.constant 1.600000e+01 : f32
    %14 = vector.broadcast %cst_11 : f32 to vector<2x1xf32>
    %15 = arith.divf %13, %14 : vector<2x1xf32>
    %cst_12 = arith.constant dense<0.000000e+00> : vector<2xf32>
    %16 = vector.multi_reduction <add>, %3, %cst_12 [1] : vector<2x16xf32> to vector<2xf32>
    %17 = vector.shape_cast %16 : vector<2xf32> to vector<2x1xf32>
    %cst_13 = arith.constant 1.600000e+01 : f32
    %18 = vector.broadcast %cst_13 : f32 to vector<2x1xf32>
    %19 = arith.divf %17, %18 : vector<2x1xf32>
    %20 = tpu.concatenate %7, %11, %15, %19 in 1 : vector<2x1xf32>, vector<2x1xf32>, vector<2x1xf32>, vector<2x1xf32> -> vector<2x4xf32>
    %c0_14 = arith.constant 0 : index
    %c0_15 = arith.constant 0 : index
    %21 = vector.load %arg5[%c0_14, %c0_15] : memref<4x1xf32, #tpu.memory_space<vmem>>, vector<4x1xf32>
    %cst_16 = arith.constant dense<0.000000e+00> : vector<2x1xf32>
    %22 = tpu.matmul %20, %21, %cst_16 {dimension_numbers = #tpu.dot_dimension_numbers<[1], [0], [0], [1], [0, 0, 1, 1], [], []>} : vector<2x4xf32>, vector<4x1xf32>, vector<2x1xf32> -> vector<2x1xf32>
    %cst_17 = arith.constant 0.000000e+00 : f32
    %23 = vector.broadcast %cst_17 : f32 to vector<2x1xf32>
    %24 = arith.maximumf %22, %23 : vector<2x1xf32>
    %c0_18 = arith.constant 0 : index
    %c0_19 = arith.constant 0 : index
    %25 = vector.load %arg6[%c0_18, %c0_19] : memref<1x4xf32, #tpu.memory_space<vmem>>, vector<1x4xf32>
    %cst_20 = arith.constant dense<0.000000e+00> : vector<2x4xf32>
    %26 = tpu.matmul %24, %25, %cst_20 {dimension_numbers = #tpu.dot_dimension_numbers<[1], [0], [0], [1], [0, 0, 1, 1], [], []>} : vector<2x1xf32>, vector<1x4xf32>, vector<2x4xf32> -> vector<2x4xf32>
    %cst_21 = arith.constant 0.000000e+00 : f32
    %27 = vector.broadcast %cst_21 : f32 to vector<2x4xf32>
    %28 = arith.maximumf %26, %27 : vector<2x4xf32>
    %29 = vector.extract_strided_slice %28 {offsets = [0, 0], sizes = [2, 1], strides = [1, 1]} : vector<2x4xf32> to vector<2x1xf32>
    %30 = vector.broadcast %29 : vector<2x1xf32> to vector<2x16xf32>
    %31 = arith.mulf %0, %30 : vector<2x16xf32>
    %32 = vector.extract_strided_slice %28 {offsets = [0, 1], sizes = [2, 1], strides = [1, 1]} : vector<2x4xf32> to vector<2x1xf32>
    %33 = vector.broadcast %32 : vector<2x1xf32> to vector<2x16xf32>
    %34 = arith.mulf %1, %33 : vector<2x16xf32>
    %35 = vector.extract_strided_slice %28 {offsets = [0, 2], sizes = [2, 1], strides = [1, 1]} : vector<2x4xf32> to vector<2x1xf32>
    %36 = vector.broadcast %35 : vector<2x1xf32> to vector<2x16xf32>
    %37 = arith.mulf %2, %36 : vector<2x16xf32>
    %38 = vector.extract_strided_slice %28 {offsets = [0, 3], sizes = [2, 1], strides = [1, 1]} : vector<2x4xf32> to vector<2x1xf32>
    %39 = vector.broadcast %38 : vector<2x1xf32> to vector<2x16xf32>
    %40 = arith.mulf %3, %39 : vector<2x16xf32>
    %41 = tpu.concatenate %31, %34, %37, %40 in 1 : vector<2x16xf32>, vector<2x16xf32>, vector<2x16xf32>, vector<2x16xf32> -> vector<2x64xf32>
    %c0_22 = arith.constant 0 : index
    %c0_23 = arith.constant 0 : index
    %42 = vector.load %arg7[%c0_22, %c0_23] : memref<2x64xf32, #tpu.memory_space<vmem>>, vector<2x64xf32>
    tpu.vector_store %arg7[%c0_22, %c0_23], %41 {strides = array<i32>} : memref<2x64xf32, #tpu.memory_space<vmem>>, vector<2x64xf32>,
    return
  }
  func.func @transform_0(%arg0: i32) -> (i32, i32) {
    %c0_i32 = arith.constant 0 : i32
    %c0_i32_0 = arith.constant 0 : i32
    return %arg0, %c0_i32 : i32, i32
  }
  func.func @transform_1(%arg0: i32) -> (i32, i32) {
    %c0_i32 = arith.constant 0 : i32
    %c0_i32_0 = arith.constant 0 : i32
    return %arg0, %c0_i32 : i32, i32
  }
  func.func @transform_2(%arg0: i32) -> (i32, i32) {
    %c0_i32 = arith.constant 0 : i32
    %c0_i32_0 = arith.constant 0 : i32
    return %arg0, %c0_i32 : i32, i32
  }
  func.func @transform_3(%arg0: i32) -> (i32, i32) {
    %c0_i32 = arith.constant 0 : i32
    %c0_i32_0 = arith.constant 0 : i32
    return %arg0, %c0_i32 : i32, i32
  }
  func.func @transform_4(%arg0: i32) -> (i32, i32) {
    %c0_i32 = arith.constant 0 : i32
    %c0_i32_0 = arith.constant 0 : i32
    %c0_i32_1 = arith.constant 0 : i32
    return %c0_i32, %c0_i32_0 : i32, i32
  }
  func.func @transform_5(%arg0: i32) -> (i32, i32) {
    %c0_i32 = arith.constant 0 : i32
    %c0_i32_0 = arith.constant 0 : i32
    %c0_i32_1 = arith.constant 0 : i32
    return %c0_i32, %c0_i32_0 : i32, i32
  }
  func.func @transform_6(%arg0: i32) -> (i32, i32) {
    %c0_i32 = arith.constant 0 : i32
    %c0_i32_0 = arith.constant 0 : i32
    return %arg0, %c0_i32 : i32, i32
  }
}

</mosaic_0001>

<llo_original>
// kernel: tpu_custom_call.1
$region0: #{tpu_custom_call.1}
  #allocation0 [shape = 'u32[]', space=smem, size = 0x4, offset = 0x4, fixed_abs, tag = 'smem constant byte address 0x4 - core index']
  #allocation1 [shape = 'u32[144,128]{1,0:T(1,128)}', space=vmem, size = 0x12000, scoped, tag = 'internal scratch']
  %s0 = inlined_call_operand.vmem [shape: f32[2,16], index: 0, kind: input, shape index: {}]
  %s1 = inlined_call_operand.vmem [shape: f32[2,16], index: 1, kind: input, shape index: {}]
  %s2 = inlined_call_operand.vmem [shape: f32[2,16], index: 2, kind: input, shape index: {}]
  %s3 = inlined_call_operand.vmem [shape: f32[2,16], index: 3, kind: input, shape index: {}]
  %s4 = inlined_call_operand.vmem [shape: f32[4,1], index: 4, kind: input, shape index: {}]
  %s5 = inlined_call_operand.vmem [shape: f32[1,4], index: 5, kind: input, shape index: {}]
  %s6 = inlined_call_operand.hbm [shape: f32[2,64], index: 6, kind: output, shape index: {}]
  %s7 = sld [smem:[#allocation0]]
  $region34: #{tpu_custom_call.1} parent=0
    _
  %s9 = ssub.s32 1, %s7
  %s10 = scalar_select 0, %s9, %s7
  $region1: #{tpu_custom_call.1} parent=0
    #allocation2 [shape = 'u8[1024]{0}', space=vmem, size = 0x400, scoped, tag = 'output window, operand 0, single buffered']
    #allocation3 [shape = 's32[1]{0}', space=sflag, size = 0x4, scoped, tag = 'scoped memory for tpu_custom_call.1']
    %11 = vsyncpa [#allocation3], 0
    // Predicated region
    $region2: #{tpu_custom_call.1} parent=1 // pred_check
      _
    $region3: #{tpu_custom_call.1} parent=1 // pred_check_branch
      %13 = sbr.rel (0) target = $region5
    $region4: #{tpu_custom_call.1} parent=1 // pred_region
      _
    $region5: #{tpu_custom_call.1} parent=1 // pred_fallthru
      _
    // Predicated region
    $region6: #{tpu_custom_call.1} parent=1 // pred_check
      _
    $region7: #{tpu_custom_call.1} parent=1 // pred_check_branch
      %15 = sbr.rel (0) target = $region9
    $region8: #{tpu_custom_call.1} parent=1 // pred_region
      _
    $region9: #{tpu_custom_call.1} parent=1 // pred_fallthru
      _
    // Predicated region
    $region10: #{tpu_custom_call.1} parent=1 // pred_check
      _
    $region11: #{tpu_custom_call.1} parent=1 // pred_check_branch
      %17 = sbr.rel (0) target = $region13
    $region12: #{tpu_custom_call.1} parent=1 // pred_region
      _
    $region13: #{tpu_custom_call.1} parent=1 // pred_fallthru
      _
    // Predicated region
    $region14: #{tpu_custom_call.1} parent=1 // pred_check
      _
    $region15: #{tpu_custom_call.1} parent=1 // pred_check_branch
      %19 = sbr.rel (0) target = $region17
    $region16: #{tpu_custom_call.1} parent=1 // pred_region
      _
    $region17: #{tpu_custom_call.1} parent=1 // pred_fallthru
      _
    // Predicated region
    $region18: #{tpu_custom_call.1} parent=1 // pred_check
      _
    $region19: #{tpu_custom_call.1} parent=1 // pred_check_branch
      %21 = sbr.rel (0) target = $region21
    $region20: #{tpu_custom_call.1} parent=1 // pred_region
      _
    $region21: #{tpu_custom_call.1} parent=1 // pred_fallthru
      _
    // Predicated region
    $region22: #{tpu_custom_call.1} parent=1 // pred_check
      _
    $region23: #{tpu_custom_call.1} parent=1 // pred_check_branch
      %23 = sbr.rel (0) target = $region25
    $region24: #{tpu_custom_call.1} parent=1 // pred_region
      _
    $region25: #{tpu_custom_call.1} parent=1 // pred_fallthru
      _
    %v24 = vld [vmem:[%s0] sm:$0x3]
    %v25 = vld [vmem:[%s1] sm:$0x3]
    %v26 = vld [vmem:[%s2] sm:$0x3]
    %v27 = vld [vmem:[%s3] sm:$0x3]
    %vm28 = vcmask 123904
    %v29 = vsel %vm28, %v24, 0.0
    %30 = vadd.xlane.f32.xlu0 %v29
    %v31 = vpop.xlane.xlu0 %30
    %v32 = vrcp.pop 16.0
    %v33 = vmul.f32 %v31, %v32
    %v34 = vsel %vm28, %v25, 0.0
    %35 = vadd.xlane.f32.xlu0 %v34
    %v36 = vpop.xlane.xlu0 %35
    %v37 = vmul.f32 %v36, %v32
    %v38 = vsel %vm28, %v26, 0.0
    %39 = vadd.xlane.f32.xlu0 %v38
    %v40 = vpop.xlane.xlu0 %39
    %v41 = vmul.f32 %v40, %v32
    %v42 = vsel %vm28, %v27, 0.0
    %43 = vadd.xlane.f32.xlu0 %v42
    %v44 = vpop.xlane.xlu0 %43
    %v45 = vmul.f32 %v44, %v32
    %vm46 = vcmask 7168
    %v47 = vsel %vm46, %v33, %v37
    %vm48 = vcmask 15360
    %v49 = vsel %vm48, %v47, %v41
    %vm50 = vcmask 23552
    %v51 = vsel %vm50, %v49, %v45
    %v52 = vld [vmem:[%s4] sm:$0xf]
    %vm53 = vcmask 31744
    %v55 = vsel %vm53, %v51, 0
    %vm57 = vcmask 1043456
    %v59 = vsel %vm57, %v52, 0
    %61 = vmatprep.subr.mxu0 0.0
    %62 = vmatpush1.msra.mxu0 %v59
    %63 = vmatprep.subr.mxu0 0.0
    %64 = vmatpush1.msra.mxu0 0.0
    %65 = vmatprep.subr.mxu0 0.0
    %66 = vmatpush1.msra.mxu0 0.0
    %67 = vmatprep.subr.mxu0 0.0
    %68 = vmatpush1.msra.mxu0 0.0
    %69 = vmatprep.subr.mxu0 0.0
    %70 = vmatpush1.msra.mxu0 0.0
    %71 = vmatprep.subr.mxu0 0.0
    %72 = vmatpush1.msra.mxu0 0.0
    %73 = vmatprep.subr.mxu0 0.0
    %74 = vmatpush1.msra.mxu0 0.0
    %75 = vmatprep.subr.mxu0 0.0
    %76 = vmatpush1.msra.mxu0 0.0
    %77 = vmatprep.subr.mxu0 0.0
    %78 = vmatpush1.msra.mxu0 0.0
    %79 = vmatprep.subr.mxu0 0.0
    %80 = vmatpush1.msra.mxu0 0.0
    %81 = vmatprep.subr.mxu0 0.0
    %82 = vmatpush1.msra.mxu0 0.0
    %83 = vmatprep.subr.mxu0 0.0
    %84 = vmatpush1.msra.mxu0 0.0
    %85 = vmatprep.subr.mxu0 0.0
    %86 = vmatpush1.msra.mxu0 0.0
    %87 = vmatprep.subr.mxu0 0.0
    %88 = vmatpush1.msra.mxu0 0.0
    %89 = vmatprep.subr.mxu0 0.0
    %90 = vmatpush1.msra.mxu0 0.0
    %91 = vmatprep.subr.mxu0 0.0
    %92 = vmatpush1.msra.mxu0 0.0
    %93 = vmatprep.subr.mxu0 0.0
    %94 = vmatpush1.msra.mxu0 0.0
    %95 = vmatprep.subr.mxu0 0.0
    %96 = vmatpush1.msra.mxu0 0.0
    %97 = vmatprep.subr.mxu0 0.0
    %98 = vmatpush1.msra.mxu0 0.0
    %99 = vmatprep.subr.mxu0 0.0
    %100 = vmatpush1.msra.mxu0 0.0
    %101 = vmatprep.subr.mxu0 0.0
    %102 = vmatpush1.msra.mxu0 0.0
    %103 = vmatprep.subr.mxu0 0.0
    %104 = vmatpush1.msra.mxu0 0.0
    %105 = vmatprep.subr.mxu0 0.0
    %106 = vmatpush1.msra.mxu0 0.0
    %107 = vmatprep.subr.mxu0 0.0
    %108 = vmatpush1.msra.mxu0 0.0
    %109 = vmatprep.subr.mxu0 0.0
    %110 = vmatpush1.msra.mxu0 0.0
    %111 = vmatprep.subr.mxu0 0.0
    %112 = vmatpush1.msra.mxu0 0.0
    %113 = vmatprep.subr.mxu0 0.0
    %114 = vmatpush1.msra.mxu0 0.0
    %115 = vmatprep.subr.mxu0 0.0
    %116 = vmatpush1.msra.mxu0 0.0
    %117 = vmatprep.subr.mxu0 0.0
    %118 = vmatpush1.msra.mxu0 0.0
    %119 = vmatprep.subr.mxu0 0.0
    %120 = vmatpush1.msra.mxu0 0.0
    %121 = vmatprep.subr.mxu0 0.0
    %122 = vmatpush1.msra.mxu0 0.0
    %123 = vmatprep.subr.mxu0 0.0
    %124 = vmatpush1.msra.mxu0 0.0
    %125 = vmatprep.mubr.f32.mxu0 0.0
    %126 = vmatmul.mubr.f32.gmra.mrb[0].mxu0 %v55
    %v127 = vpop.f32.mrb[0].mxu0
    %v128 = vadd.f32 0.0, %v127
    %v129 = vpop.f32.mrb[0].mxu0
    %130 = vdwg.mxu0
    %v131 = vmax.f32 %v128, 0.0
    %v132 = vld [vmem:[%s5] sm:$0x1]
    %v134 = vsel %vm46, %v131, 0
    %vm136 = vcmask 1040384
    %v138 = vsel %vm136, %v132, 0
    %140 = vmatprep.subr.mxu0 0.0
    %141 = vmatpush1.msra.mxu0 %v138
    %142 = vmatprep.subr.mxu0 0.0
    %143 = vmatpush1.msra.mxu0 0.0
    %144 = vmatprep.subr.mxu0 0.0
    %145 = vmatpush1.msra.mxu0 0.0
    %146 = vmatprep.subr.mxu0 0.0
    %147 = vmatpush1.msra.mxu0 0.0
    %148 = vmatprep.subr.mxu0 0.0
    %149 = vmatpush1.msra.mxu0 0.0
    %150 = vmatprep.subr.mxu0 0.0
    %151 = vmatpush1.msra.mxu0 0.0
    %152 = vmatprep.subr.mxu0 0.0
    %153 = vmatpush1.msra.mxu0 0.0
    %154 = vmatprep.subr.mxu0 0.0
    %155 = vmatpush1.msra.mxu0 0.0
    %156 = vmatprep.subr.mxu0 0.0
    %157 = vmatpush1.msra.mxu0 0.0
    %158 = vmatprep.subr.mxu0 0.0
    %159 = vmatpush1.msra.mxu0 0.0
    %160 = vmatprep.subr.mxu0 0.0
    %161 = vmatpush1.msra.mxu0 0.0
    %162 = vmatprep.subr.mxu0 0.0
    %163 = vmatpush1.msra.mxu0 0.0
    %164 = vmatprep.subr.mxu0 0.0
    %165 = vmatpush1.msra.mxu0 0.0
    %166 = vmatprep.subr.mxu0 0.0
    %167 = vmatpush1.msra.mxu0 0.0
    %168 = vmatprep.subr.mxu0 0.0
    %169 = vmatpush1.msra.mxu0 0.0
    %170 = vmatprep.subr.mxu0 0.0
    %171 = vmatpush1.msra.mxu0 0.0
    %172 = vmatprep.subr.mxu0 0.0
    %173 = vmatpush1.msra.mxu0 0.0
    %174 = vmatprep.subr.mxu0 0.0
    %175 = vmatpush1.msra.mxu0 0.0
    %176 = vmatprep.subr.mxu0 0.0
    %177 = vmatpush1.msra.mxu0 0.0
    %178 = vmatprep.subr.mxu0 0.0
    %179 = vmatpush1.msra.mxu0 0.0
    %180 = vmatprep.subr.mxu0 0.0
    %181 = vmatpush1.msra.mxu0 0.0
    %182 = vmatprep.subr.mxu0 0.0
    %183 = vmatpush1.msra.mxu0 0.0
    %184 = vmatprep.subr.mxu0 0.0
    %185 = vmatpush1.msra.mxu0 0.0
    %186 = vmatprep.subr.mxu0 0.0
    %187 = vmatpush1.msra.mxu0 0.0
    %188 = vmatprep.subr.mxu0 0.0
    %189 = vmatpush1.msra.mxu0 0.0
    %190 = vmatprep.subr.mxu0 0.0
    %191 = vmatpush1.msra.mxu0 0.0
    %192 = vmatprep.subr.mxu0 0.0
    %193 = vmatpush1.msra.mxu0 0.0
    %194 = vmatprep.subr.mxu0 0.0
    %195 = vmatpush1.msra.mxu0 0.0
    %196 = vmatprep.subr.mxu0 0.0
    %197 = vmatpush1.msra.mxu0 0.0
    %198 = vmatprep.subr.mxu0 0.0
    %199 = vmatpush1.msra.mxu0 0.0
    %200 = vmatprep.subr.mxu0 0.0
    %201 = vmatpush1.msra.mxu0 0.0
    %202 = vmatprep.subr.mxu0 0.0
    %203 = vmatpush1.msra.mxu0 0.0
    %204 = vmatprep.mubr.f32.mxu0 0.0
    %205 = vmatmul.mubr.f32.gmra.mrb[0].mxu0 %v134
    %v206 = vpop.f32.mrb[0].mxu0
    %v207 = vadd.f32 0.0, %v206
    %v208 = vpop.f32.mrb[0].mxu0
    %209 = vdwg.mxu0
    %v210 = vmax.f32 %v207, 0.0
    %212 = vset.pattern.permute.xlu0 0
    %213 = vperm.xlu0 %212, %v210
    %v214 = vpop.permute.xlu0 %213
    %v216 = vmul.f32 %v24, %v214
    %217 = vset.pattern.permute.xlu0 1
    %218 = vperm.xlu0 %217, %v210
    %v219 = vpop.permute.xlu0 %218
    %v221 = vmul.f32 %v25, %v219
    %222 = vset.pattern.permute.xlu0 2
    %223 = vperm.xlu0 %222, %v210
    %v224 = vpop.permute.xlu0 %223
    %v226 = vmul.f32 %v26, %v224
    %227 = vset.pattern.permute.xlu0 3
    %228 = vperm.xlu0 %227, %v210
    %v229 = vpop.permute.xlu0 %228
    %v231 = vmul.f32 %v27, %v229
    %233 = vrot.lane.b32.xlu0 %v221, 16
    %v234 = vpop.permute.xlu0 %233
    %237 = vrot.lane.b32.xlu0 %v226, 32
    %v238 = vpop.permute.xlu0 %237
    %241 = vrot.lane.b32.xlu0 %v231, 48
    %v242 = vpop.permute.xlu0 %241
    %vm244 = vcmask 130048
    %v245 = vsel %vm244, %v216, %v234
    %vm246 = vcmask 261120
    %v247 = vsel %vm246, %v245, %v238
    %vm248 = vcmask 392192
    %v249 = vsel %vm248, %v247, %v242
    %vm250 = vcmask 517120
    %251 = vst.msk [vmem:[#allocation2] sm:$0x3] %vm250, %v249
    // Predicated region
    $region26: #{tpu_custom_call.1} parent=1 // pred_check
      _
    $region27: #{tpu_custom_call.1} parent=1 // pred_check_branch
      %253 = sbr.rel (0) target = $region29
    $region28: #{tpu_custom_call.1} parent=1 // pred_region
      %s255 = ssub.s32 32, 32
      %256 = vsyncadd [#allocation3], %s255
      %s258 = sshll.u32 [#allocation2], 4
      %s259 = int_to_ptr.vmem [resolvable:$true] %s258
      %261 = dma.vmem_to_hbm [thread:$0]  %s259, 32, %s6, [#allocation3]
    $region29: #{tpu_custom_call.1} parent=1 // pred_fallthru
      _
    // Predicated region
    $region30: #{tpu_custom_call.1} parent=1 // pred_check
      _
    $region31: #{tpu_custom_call.1} parent=1 // pred_check_branch
      %263 = sbr.rel (0) target = $region33
    $region32: #{tpu_custom_call.1} parent=1 // pred_region
      %264 = dma.done [#allocation3], 32
    $region33: #{tpu_custom_call.1} parent=1 // pred_fallthru
      _
    %265 = vsyncpa [#allocation3], 1

</llo_original>
